<compile_context>
chip_gen: v7x
topology: tpu7x:2x2x1
jax: 0.10.0
libtpu: 0.0.40
codegen_flags: <defaults>
</compile_context>

<pallas_src>
import jax
import jax.numpy as jnp
import numpy as np
from jax.experimental import pallas as pl
from jax.experimental.pallas import tpu as pltpu


# ---------------------------------------------------------------------------
# Weight packing (wrapper / trace time)
# ---------------------------------------------------------------------------
def _pack_weights(weight, bias, fold, dtype):
    """Pack ConvTranspose1d(k=4, s=2, p=1) weights for the folded formulation.

    weight: (Cin, Cout, 4) PyTorch ConvTranspose1d layout, taps k=0..3
    Output columns of the main block (per fold-row of F positions), Cout wide each:
        [even_0, odd_0, even_1, odd_1, ..., even_{F-1}, odd_{F-1}]
    with   even_j = x_j @ w1 + x_{j-1} @ w3      (x_{-1} comes from the prev fold-row)
           odd_j  = x_j @ w2 + x_{j+1} @ w0      (x_{F}  comes from the next fold-row)
    Two extra tap columns carry the cross-fold-row terms:
        prevtap = x_{F-1} @ w3   (shifted down one fold-row -> even_0)
        nexttap = x_0     @ w0   (shifted up   one fold-row -> odd_{F-1})
    """
    cin, cout, k = weight.shape
    assert k == 4, "Upsample1D uses ConvTranspose1d(kernel_size=4)"
    F = fold
    w = weight.astype(jnp.float32)
    w0, w1, w2, w3 = w[:, :, 0], w[:, :, 1], w[:, :, 2], w[:, :, 3]

    blocks = jnp.zeros((F, cin, 2 * F, cout), jnp.float32)
    for j in range(F):
        blocks = blocks.at[j, :, 2 * j, :].set(w1)           # x_j   -> even_j
        blocks = blocks.at[j, :, 2 * j + 1, :].set(w2)       # x_j   -> odd_j
        if j >= 1:
            blocks = blocks.at[j - 1, :, 2 * j, :].set(w3)   # x_{j-1} -> even_j
        if j + 1 < F:
            blocks = blocks.at[j + 1, :, 2 * j + 1, :].set(w0)  # x_{j+1} -> odd_j
    w_main = blocks.reshape(F * cin, 2 * F * cout)

    w_prev = jnp.zeros((F, cin, cout), jnp.float32).at[F - 1].set(w3).reshape(F * cin, cout)
    w_next = jnp.zeros((F, cin, cout), jnp.float32).at[0].set(w0).reshape(F * cin, cout)

    # Weights are kept in the activation dtype so bf16 activations get native bf16 MXU passes.
    w_all = jnp.concatenate([w_main, w_prev, w_next], axis=1).astype(dtype)
    w_halo = jnp.concatenate([w3, w0], axis=1).astype(dtype)            # (Cin, 2*Cout)
    b_packed = jnp.tile(bias.astype(jnp.float32), 2 * F).reshape(1, 2 * F * cout)
    return w_all, w_halo, b_packed


# ---------------------------------------------------------------------------
# In-kernel assembly
# ---------------------------------------------------------------------------
def _assemble(y, b, cout, fix_prev, fix_next):
    """Combine the fused matmul output into interleaved even/odd output phases.

    y:        (R, 2*F*Cout + 2*Cout) f32 = [main | prevtap | nexttap]
    b:        (1, 2*F*Cout) f32 tiled bias
    fix_prev: (1, Cout) f32 boundary value for row 0      (x[before tile] @ w3, or 0)
    fix_next: (1, Cout) f32 boundary value for row R-1    (x[after  tile] @ w0, or 0)
    """
    r = y.shape[0]
    cw = b.shape[-1]
    main = y[:, :cw]
    prevtap = y[:, cw:cw + cout]          # x[last pos of fold-row]  @ w3
    nexttap = y[:, cw + cout:]            # x[first pos of fold-row] @ w0
    if r > 1:
        # Shift the narrow (Cout-lane) tap slabs by one fold-row; the row that would wrap is
        # supplied explicitly, so no full-tile masking is needed and the direction is correct
        # by construction.  These slabs are tiny compared with the x/out tiles.
        sp = jnp.concatenate([fix_prev, prevtap[:r - 1]], axis=0)   # row g = prevtap[g-1]
        sn = jnp.concatenate([nexttap[1:], fix_next], axis=0)       # row g = nexttap[g+1]
    else:
        sp, sn = fix_prev, fix_next
    left = main[:, :cout] + sp            # even_0 column block
    right = main[:, cw - cout:] + sn      # odd_{F-1} column block
    if cw > 2 * cout:
        out = jnp.concatenate([left, main[:, cout:cw - cout], right], axis=1)
    else:                                 # F == 1: just [even | odd]
        out = jnp.concatenate([left, right], axis=1)
    return out + b


def _upsample1d_kernel_nohalo(x_ref, w_ref, b_ref, o_ref):
    # Single length tile per batch element: the sequence boundaries get zero tap terms.
    # x_ref: (1, R, F*Cin)   w_ref: (F*Cin, 2*F*Cout + 2*Cout)   b_ref: (1, 2*F*Cout) f32
    cout = (w_ref.shape[1] - b_ref.shape[1]) // 2
    y = jnp.dot(x_ref[0], w_ref[...], preferred_element_type=jnp.float32)
    zero = jnp.zeros((1, cout), jnp.float32)
    out = _assemble(y, b_ref[...], cout, zero, zero)
    o_ref[0] = out.astype(o_ref.dtype)    # one lane-dense full-tile store


def _upsample1d_kernel_halo(x_ref, prev_ref, next_ref, w_ref, wh_ref, b_ref, o_ref):
    # Tiled-L variant: one x position of halo on each side of the tile.
    # prev_ref/next_ref: (1, H, F*Cin) sublane-aligned blocks; wh_ref: (Cin, 2*Cout) = [w3|w0].
    i = pl.program_id(1)
    n_lt = pl.num_programs(1)
    cin = wh_ref.shape[0]
    cout = wh_ref.shape[1] // 2
    h = prev_ref.shape[1]
    fcin = x_ref.shape[2]

    prev_pos = prev_ref[0, h - 1:h, fcin - cin:]      # (1, Cin) == x[i*R*F - 1]
    next_pos = next_ref[0, 0:1, :cin]                 # (1, Cin) == x[(i+1)*R*F]
    # Zero only at the true sequence boundaries (single-row, scalar-predicated select).
    prev_pos = jnp.where(i == 0, jnp.zeros_like(prev_pos), prev_pos)
    next_pos = jnp.where(i == n_lt - 1, jnp.zeros_like(next_pos), next_pos)
    hy = jnp.dot(jnp.concatenate([prev_pos, next_pos], axis=0), wh_ref[...],
                 preferred_element_type=jnp.float32)  # (2, 2*Cout)
    fix_prev = hy[0:1, :cout]                         # x[prev] @ w3
    fix_next = hy[1:2, cout:]                         # x[next] @ w0

    y = jnp.dot(x_ref[0], w_ref[...], preferred_element_type=jnp.float32)
    out = _assemble(y, b_ref[...], cout, fix_prev, fix_next)
    o_ref[0] = out.astype(o_ref.dtype)


# ---------------------------------------------------------------------------
# Sizing heuristics
# ---------------------------------------------------------------------------
def _vmem_capacity_bytes():
    try:
        info = pltpu.get_tpu_info()
        cap = getattr(info, "vmem_capacity_bytes", None)
        if cap:
            return int(cap)
    except Exception:
        pass
    return 64 * 1024 * 1024   # conservative (v7x per-TensorCore VMEM)


def _choose_fold(L, cin, cout):
    """Fold factor F: fold F length positions into lanes so the output tile is lane-dense
    (2*F*Cout >= 128) without blowing up the banded weight / contraction (F*Cin <= 512)."""
    if 2 * cout >= 128 or L <= 1:
        return 1
    cap = min(64, L, max(1, 512 // max(cin, 1)))
    target = -(-64 // cout)                      # ceil(64 / cout)
    divs = [d for d in range(1, cap + 1) if L % d == 0]
    good = [d for d in divs if d >= target]
    return min(good) if good else max(divs)


def _est_vmem_bytes(r, n_tiles, fold, cin, cout, itemsize, halo_rows):
    """VMEM use per grid step, counting double-buffered operands AND in-kernel temporaries."""
    fcin = fold * cin
    cw = 2 * fold * cout
    wcols = cw + 2 * cout
    b = 2 * r * fcin * itemsize                  # x tile (double-buffered)
    b += 2 * r * cw * itemsize                   # out tile (double-buffered)
    b += 2 * fcin * wcols * itemsize             # packed weight
    b += 2 * cw * 4                              # packed bias (f32)
    if n_tiles > 1:
        b += 2 * 2 * halo_rows * fcin * itemsize  # two halo blocks (double-buffered)
        b += 2 * cin * 2 * cout * itemsize        # halo weight
    # in-kernel f32 temporaries: y, assembly/concat copies, pre-store cast, tap slabs
    b += r * wcols * 4
    b += 2 * r * cw * 4
    b += r * cw * itemsize
    b += 4 * r * cout * 4
    return b


def _choose_tile_rows(Lf, N, fold, cin, cout, itemsize, sub, budget):
    """Pick the fold-row tile size R (multiple of the packed sublane tile `sub`)."""
    if Lf <= sub:
        return Lf
    divs = [d for d in range(sub, Lf + 1, sub) if Lf % d == 0]
    if not divs:
        # TODO(synk): masked ragged tail tile; fall back to a single full-Lf tile.
        return Lf

    def est(d):
        return _est_vmem_bytes(d, Lf // d, fold, cin, cout, itemsize, sub)

    fits = [d for d in divs if est(d) <= budget]
    if not fits:
        return divs[0]
    fits.sort(reverse=True)
    best = fits[0]
    # v7x megacore: with an odd total grid one TensorCore idles on the tail;
    # accept up to a 2x smaller tile to make N * n_lt even.
    if (N * (Lf // best)) % 2 == 1:
        for d in fits:
            if (N * (Lf // d)) % 2 == 0 and 2 * d >= best:
                best = d
                break
    return best


# ---------------------------------------------------------------------------
# Entry points
# ---------------------------------------------------------------------------
def upsample1d_nlc(x_nlc, weight, bias, *, fold=None, tl=None):
    """ConvTranspose1d(k=4, s=2, p=1) in channels-last layout (no transposes needed).

    x_nlc:  (N, L, Cin)
    weight: (Cin, Cout, 4)   -- PyTorch ConvTranspose1d weight layout
    bias:   (Cout,)
    fold:   optional fold factor F (defaults to an auto choice; must divide L)
    tl:     optional length-tile size in FOLD ROWS (must divide L // F)
    returns (N, 2*L, Cout)
    """
    N, L, Cin = x_nlc.shape
    if weight.shape[0] != Cin:
        raise ValueError("weight Cin mismatch")
    Cout = weight.shape[1]
    dtype = x_nlc.dtype
    itemsize = jnp.dtype(dtype).itemsize
    sub = max(8, 8 * (4 // max(itemsize, 1)))    # 8 rows f32, 16 bf16, 32 int8/fp8

    F = int(fold) if fold is not None else _choose_fold(L, Cin, Cout)
    if F < 1 or L % F != 0:
        raise ValueError(f"fold={F} must be >= 1 and divide L={L}")
    Lf = L // F
    fcin = F * Cin
    cw = 2 * F * Cout
    wcols = cw + 2 * Cout

    w_all, w_halo, b_packed = _pack_weights(weight, bias, F, dtype)
    xf = x_nlc.reshape(N, Lf, fcin)              # free contiguous reshape

    cap = _vmem_capacity_bytes()
    budget = min(28 << 20, (cap * 35) // 100)    # ~22 MiB on v7x (64 MiB), 28 MiB on v5e/v6e

    if tl is None:
        r = _choose_tile_rows(Lf, N, F, Cin, Cout, itemsize, sub, budget)
    else:
        r = int(tl)
        if r <= 0 or Lf % r != 0:
            raise ValueError(f"tl={r} must divide the fold-row count {Lf}")
        if Lf // r > 1 and r % sub != 0:
            raise ValueError(f"tl={r} must be a multiple of {sub} rows when tiling L")
    n_lt = Lf // r

    est = _est_vmem_bytes(r, n_lt, F, Cin, Cout, itemsize, sub)
    vmem_limit = int(min(cap // 2, max(2 * est + (8 << 20), 24 << 20)))

    flops = 2 * N * Lf * fcin * wcols + 2 * N * n_lt * 2 * Cin * 2 * Cout
    bytes_acc = (N * Lf * fcin + N * Lf * cw) * itemsize
    bytes_acc += (fcin * wcols + Cin * 2 * Cout) * itemsize + cw * 4
    if n_lt > 1:
        bytes_acc += N * n_lt * 2 * sub * fcin * itemsize
    cost = pl.CostEstimate(flops=int(flops), transcendentals=0,
                           bytes_accessed=int(bytes_acc))

    if n_lt == 1:
        out = pl.pallas_call(
            _upsample1d_kernel_nohalo,
            out_shape=jax.ShapeDtypeStruct((N, Lf, cw), dtype),
            grid_spec=pltpu.PrefetchScalarGridSpec(
                num_scalar_prefetch=0,
                grid=(N,),
                in_specs=[
                    pl.BlockSpec((1, Lf, fcin), lambda n: (n, 0, 0)),
                    pl.BlockSpec((fcin, wcols), lambda n: (0, 0)),
                    pl.BlockSpec((1, cw), lambda n: (0, 0)),
                ],
                out_specs=pl.BlockSpec((1, Lf, cw), lambda n: (n, 0, 0)),
            ),
            compiler_params=pltpu.CompilerParams(
                dimension_semantics=("parallel",),
                vmem_limit_bytes=vmem_limit),
            cost_estimate=cost,
        )(xf, w_all, b_packed)
    else:
        halo_stride = r // sub
        last_blk = Lf // sub - 1

        def x_map(n, i):
            return (n, i, 0)

        def prev_map(n, i):                       # block holding fold-row i*R - 1
            return (n, jnp.maximum(i * halo_stride - 1, 0), 0)

        def next_map(n, i):                       # block holding fold-row (i+1)*R
            return (n, jnp.minimum((i + 1) * halo_stride, last_blk), 0)

        out = pl.pallas_call(
            _upsample1d_kernel_halo,
            out_shape=jax.ShapeDtypeStruct((N, Lf, cw), dtype),
            grid_spec=pltpu.PrefetchScalarGridSpec(
                num_scalar_prefetch=0,
                grid=(N, n_lt),
                in_specs=[
                    pl.BlockSpec((1, r, fcin), x_map),
                    pl.BlockSpec((1, sub, fcin), prev_map),
                    pl.BlockSpec((1, sub, fcin), next_map),
                    pl.BlockSpec((fcin, wcols), lambda n, i: (0, 0)),
                    pl.BlockSpec((Cin, 2 * Cout), lambda n, i: (0, 0)),
                    pl.BlockSpec((1, cw), lambda n, i: (0, 0)),
                ],
                out_specs=pl.BlockSpec((1, r, cw), x_map),
            ),
            compiler_params=pltpu.CompilerParams(
                dimension_semantics=("parallel", "parallel"),
                vmem_limit_bytes=vmem_limit),
            cost_estimate=cost,
        )(xf, xf, xf, w_all, w_halo, b_packed)

    # (N, Lf, 2*F*Cout) -> (N, 2L, Cout): contiguous, free (columns are already in time order).
    return out.reshape(N, 2 * L, Cout)


def upsample1d_forward(x_ncl, weight, bias, *, fold=None, tl=None):
    """PyTorch-layout Upsample1D.forward (use_conv_transpose=True): (N, Cin, L) -> (N, Cout, 2L).

    The two transposes are only layout adapters for the PyTorch NCL convention; channels-last
    callers should use `upsample1d_nlc` directly and skip both extra HBM passes.
    """
    # TODO(synk): fuse the NCL<->NLC layout change into the kernel (in-tile XLU transpose)
    # instead of two standalone HBM transposes for callers stuck on the NCL layout.
    x_nlc = jnp.transpose(x_ncl, (0, 2, 1))
    out_nlc = upsample1d_nlc(x_nlc, weight, bias, fold=fold, tl=tl)
    return jnp.transpose(out_nlc, (0, 2, 1))


# ---------------------------------------------------------------------------
# Reference + tests
# ---------------------------------------------------------------------------
def _ref_conv_transpose1d(x, w, b, stride=2, padding=1):
    """Naive numpy reference for nn.ConvTranspose1d(Cin, Cout, 4, 2, 1)."""
    N, Cin, L = x.shape
    Cout, K = w.shape[1], w.shape[2]
    Lout = (L - 1) * stride - 2 * padding + K
    out = np.tile(b.reshape(1, Cout, 1), (N, 1, Lout)).astype(np.float64)
    for n in range(N):
        for ic in range(Cin):
            for l in range(L):
                for k in range(K):
                    p = l * stride - padding + k
                    if 0 <= p < Lout:
                        out[n, :, p] += x[n, ic, l] * w[ic, :, k]
    return out


if __name__ == "__main__":
    N, C, L = 2, 8, 16
    K = 4  # ConvTranspose1d kernel size from Upsample1D.__init__

    key = jax.random.PRNGKey(0)
    kx, kw, kb, kx2, kx3, kw2, kb2 = jax.random.split(key, 7)

    x = jax.random.normal(kx, (N, C, L), dtype=jnp.float32)
    bound = 1.0 / np.sqrt(C * K)
    weight = jax.random.uniform(kw, (C, C, K), dtype=jnp.float32, minval=-bound, maxval=bound)
    bias = jax.random.uniform(kb, (C,), dtype=jnp.float32, minval=-bound, maxval=bound)

    # 1) f32, folded lane-dense path (F=8 -> single no-halo tile per batch element).
    out = jax.block_until_ready(upsample1d_forward(x, weight, bias))
    assert out.shape == (N, C, 2 * L), out.shape
    ref = _ref_conv_transpose1d(np.asarray(x), np.asarray(weight), np.asarray(bias))
    np.testing.assert_allclose(np.asarray(out), ref, rtol=5e-4, atol=5e-4)

    # 2) bf16 inputs/weights (f32 accumulation inside the kernel), bf16 output.
    out_bf16 = jax.block_until_ready(
        upsample1d_forward(x.astype(jnp.bfloat16), weight, bias))
    np.testing.assert_allclose(np.asarray(out_bf16, dtype=np.float32), ref,
                               rtol=5e-2, atol=5e-2)

    # 3) Tiled-L halo path: L=256 -> F=8, 32 fold rows, tl=8 -> 4 length tiles per batch.
    L2 = 256
    x_long = jax.random.normal(kx2, (N, C, L2), dtype=jnp.float32)
    out_t = jax.block_until_ready(upsample1d_forward(x_long, weight, bias, tl=8))
    ref_t = _ref_conv_transpose1d(np.asarray(x_long), np.asarray(weight), np.asarray(bias))
    np.testing.assert_allclose(np.asarray(out_t), ref_t, rtol=5e-4, atol=5e-4)

    # 4) F == 1 path (channels already lane-dense): C=64.
    C2 = 64
    bound2 = 1.0 / np.sqrt(C2 * K)
    x_wide = jax.random.normal(kx3, (N, C2, L), dtype=jnp.float32)
    w_wide = jax.random.uniform(kw2, (C2, C2, K), dtype=jnp.float32, minval=-bound2, maxval=bound2)
    b_wide = jax.random.uniform(kb2, (C2,), dtype=jnp.float32, minval=-bound2, maxval=bound2)
    out_w = jax.block_until_ready(upsample1d_forward(x_wide, w_wide, b_wide))
    ref_w = _ref_conv_transpose1d(np.asarray(x_wide), np.asarray(w_wide), np.asarray(b_wide))
    np.testing.assert_allclose(np.asarray(out_w), ref_w, rtol=5e-4, atol=5e-4)

    print("KERNEL_OK")
</pallas_src>

<mosaic_0001>
module attributes {stable_mosaic.version = 11 : i64} {
  func.func @_upsample1d_kernel_nohalo(%arg0: i32, %arg1: memref<1x2x64xf32, #tpu.memory_space<vmem>>, %arg2: memref<64x144xf32, #tpu.memory_space<vmem>>, %arg3: memref<1x128xf32, #tpu.memory_space<vmem>>, %arg4: memref<1x2x128xf32, #tpu.memory_space<vmem>>) attributes {dimension_semantics = [#tpu.dimension_semantics<parallel>], iteration_bounds = array<i64: 2>, scalar_prefetch = 0 : i64, scratch_operands = 0 : i64, tpu.core_type = #tpu.core_type<tc>, window_params = [{transform_indices = @transform_0, window_bounds = array<i64: 1, 2, 64>}, {pipeline_mode = #tpu.pipeline_mode<synchronous>, transform_indices = @transform_1, window_bounds = array<i64: 64, 144>}, {pipeline_mode = #tpu.pipeline_mode<synchronous>, transform_indices = @transform_2, window_bounds = array<i64: 1, 128>}, {transform_indices = @transform_3, window_bounds = array<i64: 1, 2, 128>}]} {
    %c0 = arith.constant 0 : index
    %c0_0 = arith.constant 0 : index
    %c0_1 = arith.constant 0 : index
    %0 = vector.load %arg1[%c0, %c0_0, %c0_1] : memref<1x2x64xf32, #tpu.memory_space<vmem>>, vector<1x2x64xf32>
    %1 = vector.shape_cast %0 : vector<1x2x64xf32> to vector<2x64xf32>
    %c0_2 = arith.constant 0 : index
    %c0_3 = arith.constant 0 : index
    %2 = vector.load %arg2[%c0_2, %c0_3] : memref<64x144xf32, #tpu.memory_space<vmem>>, vector<64x144xf32>
    %cst = arith.constant dense<0.000000e+00> : vector<2x144xf32>
    %3 = tpu.matmul %1, %2, %cst {dimension_numbers = #tpu.dot_dimension_numbers<[1], [0], [0], [1], [0, 0, 1, 1], [], []>} : vector<2x64xf32>, vector<64x144xf32>, vector<2x144xf32> -> vector<2x144xf32>
    %cst_4 = arith.constant 0.000000e+00 : f32
    %4 = vector.broadcast %cst_4 : f32 to vector<1x8xf32>
    %c0_5 = arith.constant 0 : index
    %c0_6 = arith.constant 0 : index
    %5 = vector.load %arg3[%c0_5, %c0_6] : memref<1x128xf32, #tpu.memory_space<vmem>>, vector<1x128xf32>
    %6 = vector.extract_strided_slice %3 {offsets = [0, 0], sizes = [2, 128], strides = [1, 1]} : vector<2x144xf32> to vector<2x128xf32>
    %7 = vector.extract_strided_slice %3 {offsets = [0, 128], sizes = [2, 8], strides = [1, 1]} : vector<2x144xf32> to vector<2x8xf32>
    %8 = vector.extract_strided_slice %3 {offsets = [0, 136], sizes = [2, 8], strides = [1, 1]} : vector<2x144xf32> to vector<2x8xf32>
    %9 = vector.extract_strided_slice %7 {offsets = [0, 0], sizes = [1, 8], strides = [1, 1]} : vector<2x8xf32> to vector<1x8xf32>
    %10 = tpu.concatenate %4, %9 in 0 : vector<1x8xf32>, vector<1x8xf32> -> vector<2x8xf32>
    %11 = vector.extract_strided_slice %8 {offsets = [1, 0], sizes = [1, 8], strides = [1, 1]} : vector<2x8xf32> to vector<1x8xf32>
    %12 = tpu.concatenate %11, %4 in 0 : vector<1x8xf32>, vector<1x8xf32> -> vector<2x8xf32>
    %13 = vector.extract_strided_slice %6 {offsets = [0, 0], sizes = [2, 8], strides = [1, 1]} : vector<2x128xf32> to vector<2x8xf32>
    %14 = arith.addf %13, %10 : vector<2x8xf32>
    %15 = vector.extract_strided_slice %6 {offsets = [0, 120], sizes = [2, 8], strides = [1, 1]} : vector<2x128xf32> to vector<2x8xf32>
    %16 = arith.addf %15, %12 : vector<2x8xf32>
    %17 = vector.extract_strided_slice %6 {offsets = [0, 8], sizes = [2, 112], strides = [1, 1]} : vector<2x128xf32> to vector<2x112xf32>
    %18 = tpu.concatenate %14, %17, %16 in 1 : vector<2x8xf32>, vector<2x112xf32>, vector<2x8xf32> -> vector<2x128xf32>
    %19 = vector.broadcast %5 : vector<1x128xf32> to vector<2x128xf32>
    %20 = arith.addf %18, %19 : vector<2x128xf32>
    %c0_7 = arith.constant 0 : index
    %c0_8 = arith.constant 0 : index
    %c0_9 = arith.constant 0 : index
    %21 = vector.load %arg4[%c0_7, %c0_8, %c0_9] : memref<1x2x128xf32, #tpu.memory_space<vmem>>, vector<1x2x128xf32>
    %22 = vector.shape_cast %21 : vector<1x2x128xf32> to vector<2x128xf32>
    %23 = vector.shape_cast %20 : vector<2x128xf32> to vector<1x2x128xf32>
    tpu.vector_store %arg4[%c0_7, %c0_8, %c0_9], %23 {strides = array<i32>} : memref<1x2x128xf32, #tpu.memory_space<vmem>>, vector<1x2x128xf32>,
    return
  }
  func.func @transform_0(%arg0: i32) -> (i32, i32, i32) {
    %c0_i32 = arith.constant 0 : i32
    %c0_i32_0 = arith.constant 0 : i32
    %c0_i32_1 = arith.constant 0 : i32
    return %arg0, %c0_i32, %c0_i32_0 : i32, i32, i32
  }
  func.func @transform_1(%arg0: i32) -> (i32, i32) {
    %c0_i32 = arith.constant 0 : i32
    %c0_i32_0 = arith.constant 0 : i32
    %c0_i32_1 = arith.constant 0 : i32
    return %c0_i32, %c0_i32_0 : i32, i32
  }
  func.func @transform_2(%arg0: i32) -> (i32, i32) {
    %c0_i32 = arith.constant 0 : i32
    %c0_i32_0 = arith.constant 0 : i32
    %c0_i32_1 = arith.constant 0 : i32
    return %c0_i32, %c0_i32_0 : i32, i32
  }
  func.func @transform_3(%arg0: i32) -> (i32, i32, i32) {
    %c0_i32 = arith.constant 0 : i32
    %c0_i32_0 = arith.constant 0 : i32
    %c0_i32_1 = arith.constant 0 : i32
    return %arg0, %c0_i32, %c0_i32_0 : i32, i32, i32
  }
}

</mosaic_0001>

<llo_original>
// kernel: tpu_custom_call.1
$region0: #{tpu_custom_call.1}
  #allocation0 [shape = 'u32[]', space=smem, size = 0x4, offset = 0x4, fixed_abs, tag = 'smem constant byte address 0x4 - core index']
  #allocation1 [shape = 'u32[144,128]{1,0:T(1,128)}', space=vmem, size = 0x12000, scoped, tag = 'internal scratch']
  %s0 = inlined_call_operand.hbm [shape: f32[2,2,64], index: 0, kind: input, shape index: {}]
  %s1 = inlined_call_operand.hbm [shape: f32[64,144], index: 1, kind: input, shape index: {}]
  %s2 = inlined_call_operand.vmem [shape: f32[1,128], index: 2, kind: input, shape index: {}]
  %s3 = inlined_call_operand.hbm [shape: f32[2,2,128], index: 3, kind: output, shape index: {}]
  %s4 = sld [smem:[#allocation0]]
  $region53: #{tpu_custom_call.1} parent=0
    _
  %s6 = ssub.s32 1, %s4
  %s7 = scalar_select 0, %s6, %s4
  $region1: #{tpu_custom_call.1} parent=0
    #allocation2 [shape = 'u8[2048]{0}', space=vmem, size = 0x800, scoped, tag = 'input window, operand 0']
    #allocation3 [shape = 's32[2]{0}', space=sflag, size = 0x8, scoped, tag = 'scoped memory for tpu_custom_call.1']
    #allocation4 [shape = 's32[2]{0}', space=sflag, size = 0x8, scoped, tag = 'scoped memory for tpu_custom_call.1']
    #allocation5 [shape = 'u8[65536]{0}', space=vmem, size = 0x10000, scoped, tag = 'input window, operand 1, single buffered']
    #allocation6 [shape = 's32[1]{0}', space=sflag, size = 0x4, scoped, tag = 'scoped memory for tpu_custom_call.1']
    #allocation7 [shape = 'u8[2048]{0}', space=vmem, size = 0x800, scoped, tag = 'output window, operand 0']
    %8 = vsyncpa [#allocation3], 0
    %s9 = scalar_lea.sflag [#allocation3], 1
    %10 = vsyncpa %s9, 0
    %11 = vsyncpa [#allocation6], 0
    %12 = vsyncpa [#allocation4], 0
    %s13 = scalar_lea.sflag [#allocation4], 1
    %14 = vsyncpa %s13, 0
    loop: start=0, step=1, limit=4
    $region2: #{tpu_custom_call.1} parent=1 // loop_pre_header
      _
    $region3: #{tpu_custom_call.1} parent=1 // loop_header
      %s16 = sphi 0, %s20
      %p17 = scmp.ge.s32.totalorder %s16, 4
      %s26 = sphi 0, %s28
      %s29 = sphi 0, %s26
      %s30 = sphi 0, %s29
      %s46 = sphi 0, %s30
      %s50 = sphi 0, %s50
      %s52 = sphi 0, %s50
      %s53 = sphi 0, %s52
      %s67 = sphi 0, %s53
      %s71 = sphi 0, %s71
      %s73 = sphi 0, %s71
      %s74 = sphi 0, %s73
      %s88 = sphi 0, %s74
      %s94 = sphi 0, %s96
      %s97 = sphi 0, %s94
      %s98 = sphi 0, %s97
      %s114 = sphi 0, %s98
    $region4: #{tpu_custom_call.1} parent=1 // loop_header_branch
      %19 = sbr.rel (%p17) target = $region8
    $region5: #{tpu_custom_call.1} parent=1 // loop_body
      %s21 = ssub.s32 %s16, 1
      %s22 = ssub.s32 %s16, 2
      %s23 = sadd.s32 %s16, 1
      %s24 = ssub.s32 %s16, %s23
      %p25 = scmp.eq.s32.totalorder %s24, 0
      %s27 = sadd.s32 %s26, 1
      %s28 = scalar_select %p25, %s26, %s27
      %p31 = pneg %p25
      %p32 = scmp.eq.s32.totalorder %s16, 1
      %p33 = por %p31, %p32
      %p34 = scmp.ne.s32.totalorder %s26, %s29
      %p35 = scmp.eq.s32.totalorder %s16, 0
      %p36 = por %p34, %p35
      %p37 = scmp.ne.s32.totalorder %s26, %s29
      %p38 = scmp.eq.s32.totalorder %s21, 1
      %p39 = por %p37, %p38
      %p40 = scmp.ne.s32.totalorder %s29, %s30
      %p41 = scmp.eq.s32.totalorder %s21, 0
      %p42 = por %p40, %p41
      %p43 = scmp.ne.s32.totalorder %s29, %s30
      %p44 = scmp.eq.s32.totalorder %s22, 1
      %p45 = por %p43, %p44
      %p47 = scmp.ne.s32.totalorder %s30, %s46
      %p48 = scmp.eq.s32.totalorder %s22, 0
      %p49 = por %p47, %p48
      %s51 = sadd.s32 %s50, 1
      %p54 = scmp.eq.s32.totalorder %s16, 1
      %p55 = scmp.ne.s32.totalorder %s50, %s52
      %p56 = scmp.eq.s32.totalorder %s16, 0
      %p57 = por %p55, %p56
      %p58 = scmp.ne.s32.totalorder %s50, %s52
      %p59 = scmp.eq.s32.totalorder %s21, 1
      %p60 = por %p58, %p59
      %p61 = scmp.ne.s32.totalorder %s52, %s53
      %p62 = scmp.eq.s32.totalorder %s21, 0
      %p63 = por %p61, %p62
      %p64 = scmp.ne.s32.totalorder %s52, %s53
      %p65 = scmp.eq.s32.totalorder %s22, 1
      %p66 = por %p64, %p65
      %p68 = scmp.ne.s32.totalorder %s53, %s67
      %p69 = scmp.eq.s32.totalorder %s22, 0
      %p70 = por %p68, %p69
      %s72 = sadd.s32 %s71, 1
      %p75 = scmp.eq.s32.totalorder %s16, 1
      %p76 = scmp.ne.s32.totalorder %s71, %s73
      %p77 = scmp.eq.s32.totalorder %s16, 0
      %p78 = por %p76, %p77
      %p79 = scmp.ne.s32.totalorder %s71, %s73
      %p80 = scmp.eq.s32.totalorder %s21, 1
      %p81 = por %p79, %p80
      %p82 = scmp.ne.s32.totalorder %s73, %s74
      %p83 = scmp.eq.s32.totalorder %s21, 0
      %p84 = por %p82, %p83
      %p85 = scmp.ne.s32.totalorder %s73, %s74
      %p86 = scmp.eq.s32.totalorder %s22, 1
      %p87 = por %p85, %p86
      %p89 = scmp.ne.s32.totalorder %s74, %s88
      %p90 = scmp.eq.s32.totalorder %s22, 0
      %p91 = por %p89, %p90
      %s92 = ssub.s32 %s16, %s23
      %p93 = scmp.eq.s32.totalorder %s92, 0
      %s95 = sadd.s32 %s94, 1
      %s96 = scalar_select %p93, %s94, %s95
      %p99 = pneg %p93
      %p100 = scmp.eq.s32.totalorder %s16, 1
      %p101 = por %p99, %p100
      %p102 = scmp.ne.s32.totalorder %s94, %s97
      %p103 = scmp.eq.s32.totalorder %s16, 0
      %p104 = por %p102, %p103
      %p105 = scmp.ne.s32.totalorder %s94, %s97
      %p106 = scmp.eq.s32.totalorder %s21, 1
      %p107 = por %p105, %p106
      %p108 = scmp.ne.s32.totalorder %s97, %s98
      %p109 = scmp.eq.s32.totalorder %s21, 0
      %p110 = por %p108, %p109
      %p111 = scmp.ne.s32.totalorder %s97, %s98
      %p112 = scmp.eq.s32.totalorder %s22, 1
      %p113 = por %p111, %p112
      %p115 = scmp.ne.s32.totalorder %s98, %s114
      %p116 = scmp.eq.s32.totalorder %s22, 0
      %p117 = por %p115, %p116
      %p118 = scmp.le.s32.totalorder 1, %s16
      %p119 = scmp.lt.s32.totalorder %s16, 3
      %p120 = pnand %p118, %p119
      %p121 = pneg %p120
      // Predicated region
      $region9: #{tpu_custom_call.1} parent=5 // pred_check
        _
      $region10: #{tpu_custom_call.1} parent=5 // pred_check_branch
        %123 = sbr.rel (%p120) target = $region12
      $region11: #{tpu_custom_call.1} parent=5 // pred_region
        %s124 = ssub.s32 %s16, 1
        // Predicated region
        $region13: #{tpu_custom_call.1} parent=11 // pred_check
          %p125 = pneg %p63
        $region14: #{tpu_custom_call.1} parent=11 // pred_check_branch
          %127 = sbr.rel (%p125) target = $region16
        $region15: #{tpu_custom_call.1} parent=11 // pred_region
          %s129 = ssub.s32 2048, 2048
          %130 = vsyncadd [#allocation6], %s129
          %s131 = sshll.u32 [#allocation5], 4
          %s132 = int_to_ptr.vmem [resolvable:$true] %s131
          %137 = dma.hbm_to_vmem [thread:$0]  %s1, 2048, %s132, [#allocation6], 256, 256, 16
        $region16: #{tpu_custom_call.1} parent=11 // pred_fallthru
          _
        // Predicated region
        $region17: #{tpu_custom_call.1} parent=11 // pred_check
          %p138 = pneg %p84
        $region18: #{tpu_custom_call.1} parent=11 // pred_check_branch
          %140 = sbr.rel (%p138) target = $region20
        $region19: #{tpu_custom_call.1} parent=11 // pred_region
          _
        $region20: #{tpu_custom_call.1} parent=11 // pred_fallthru
          _
      $region12: #{tpu_custom_call.1} parent=5 // pred_fallthru
        _
      %p141 = scmp.lt.s32.totalorder %s16, 2
      // Predicated region
      $region21: #{tpu_custom_call.1} parent=5 // pred_check
        %p142 = pneg %p141
      $region22: #{tpu_custom_call.1} parent=5 // pred_check_branch
        %144 = sbr.rel (%p142) target = $region24
      $region23: #{tpu_custom_call.1} parent=5 // pred_region
        // Predicated region
        $region25: #{tpu_custom_call.1} parent=23 // pred_check
          %p145 = pneg %p36
        $region26: #{tpu_custom_call.1} parent=23 // pred_check_branch
          %147 = sbr.rel (%p145) target = $region28
        $region27: #{tpu_custom_call.1} parent=23 // pred_region
          %s148 = sand.u32 %s26, 1
          %s149 = scalar_lea.sflag [#allocation3], %s148
          %s150 = sand.u32 %s26, 1
          %s151 = smul.addr %s150, 2
          %s152 = scalar_lea.vmem [#allocation2], %s151
          %s154 = ssub.s32 32, 32
          %155 = vsyncadd %s149, %s154
          %s156 = smul.addr %s16, 32
          %s157 = scalar_lea.hbm %s0, %s156
          %s159 = sshll.u32 %s152, 4
          %s160 = int_to_ptr.vmem [resolvable:$true] %s159
          %162 = dma.hbm_to_vmem [thread:$0]  %s157, 32, %s160, %s149
        $region28: #{tpu_custom_call.1} parent=23 // pred_fallthru
          _
      $region24: #{tpu_custom_call.1} parent=5 // pred_fallthru
        _
      %p163 = scmp.le.s32.totalorder 1, %s16
      %p164 = scmp.lt.s32.totalorder %s16, 3
      %p165 = pnand %p163, %p164
      %p166 = pneg %p165
      // Predicated region
      $region29: #{tpu_custom_call.1} parent=5 // pred_check
        _
      $region30: #{tpu_custom_call.1} parent=5 // pred_check_branch
        %168 = sbr.rel (%p165) target = $region32
      $region31: #{tpu_custom_call.1} parent=5 // pred_region
        %s169 = ssub.s32 %s16, 1
        %s170 = sand.u32 %s29, 1
        %s171 = scalar_lea.sflag [#allocation3], %s170
        %s172 = sand.u32 %s29, 1
        %s173 = smul.addr %s172, 2
        %s174 = scalar_lea.vmem [#allocation2], %s173
        // Predicated region
        $region33: #{tpu_custom_call.1} parent=31 // pred_check
          %p175 = pneg %p42
        $region34: #{tpu_custom_call.1} parent=31 // pred_check_branch
          %177 = sbr.rel (%p175) target = $region36
        $region35: #{tpu_custom_call.1} parent=31 // pred_region
          %178 = dma.done %s171, 32
        $region36: #{tpu_custom_call.1} parent=31 // pred_fallthru
          _
        // Predicated region
        $region37: #{tpu_custom_call.1} parent=31 // pred_check
          %p179 = pneg %p63
        $region38: #{tpu_custom_call.1} parent=31 // pred_check_branch
          %181 = sbr.rel (%p179) target = $region40
        $region39: #{tpu_custom_call.1} parent=31 // pred_region
          %182 = dma.done [#allocation6], 2048
        $region40: #{tpu_custom_call.1} parent=31 // pred_fallthru
          _
        %s183 = sand.u32 %s29, 1
        %s184 = scalar_lea.sflag [#allocation3], %s183
        %s185 = sand.u32 %s29, 1
        %s186 = smul.addr %s185, 2
        %s187 = scalar_lea.vmem [#allocation2], %s186
        %p188 = pneg %p42
        %p189 = pneg %p39
        %p190 = pneg %p63
        %p191 = pneg %p60
        %p192 = pneg %p84
        %p193 = pneg %p81
        %p194 = pneg %p110
        %p195 = pneg %p107
        %s196 = sand.u32 %s97, 1
        %s197 = scalar_lea.sflag [#allocation4], %s196
        %s198 = sand.u32 %s97, 1
        %s199 = smul.addr %s198, 2
        %s200 = scalar_lea.vmem [#allocation7], %s199
        %v201 = vld [vmem:[%s174] sm:$0x3]
        %v202 = vld [vmem:[#allocation5] sm:$0xff]
        %v203 = vld [vmem:[#allocation5 + $0x8] sm:$0xff]
        %v204 = vld [vmem:[#allocation5 + $0x10] sm:$0xff]
        %v205 = vld [vmem:[#allocation5 + $0x18] sm:$0xff]
        %v206 = vld [vmem:[#allocation5 + $0x20] sm:$0xff]
        %v207 = vld [vmem:[#allocation5 + $0x28] sm:$0xff]
        %v208 = vld [vmem:[#allocation5 + $0x30] sm:$0xff]
        %v209 = vld [vmem:[#allocation5 + $0x38] sm:$0xff]
        %v210 = vld [vmem:[#allocation5 + $0x40] sm:$0xff]
        %v211 = vld [vmem:[#allocation5 + $0x48] sm:$0xff]
        %v212 = vld [vmem:[#allocation5 + $0x50] sm:$0xff]
        %v213 = vld [vmem:[#allocation5 + $0x58] sm:$0xff]
        %v214 = vld [vmem:[#allocation5 + $0x60] sm:$0xff]
        %v215 = vld [vmem:[#allocation5 + $0x68] sm:$0xff]
        %v216 = vld [vmem:[#allocation5 + $0x70] sm:$0xff]
        %v217 = vld [vmem:[#allocation5 + $0x78] sm:$0xff]
        %vm218 = vcmask 523264
        %v220 = vsel %vm218, %v201, 0
        %222 = vmatprep.subr.mxu0 %v203
        %223 = vmatpush1.msra.mxu0 %v202
        %224 = vmatprep.subr.mxu0 %v205
        %225 = vmatpush1.msra.mxu0 %v204
        %226 = vmatprep.subr.mxu0 %v207
        %227 = vmatpush1.msra.mxu0 %v206
        %228 = vmatprep.subr.mxu0 %v209
        %229 = vmatpush1.msra.mxu0 %v208
        %230 = vmatprep.subr.mxu0 %v211
        %231 = vmatpush1.msra.mxu0 %v210
        %232 = vmatprep.subr.mxu0 %v213
        %233 = vmatpush1.msra.mxu0 %v212
        %234 = vmatprep.subr.mxu0 %v215
        %235 = vmatpush1.msra.mxu0 %v214
        %236 = vmatprep.subr.mxu0 %v217
        %237 = vmatpush1.msra.mxu0 %v216
        %238 = vmatprep.subr.mxu0 0.0
        %239 = vmatpush1.msra.mxu0 0.0
        %240 = vmatprep.subr.mxu0 0.0
        %241 = vmatpush1.msra.mxu0 0.0
        %242 = vmatprep.subr.mxu0 0.0
        %243 = vmatpush1.msra.mxu0 0.0
        %244 = vmatprep.subr.mxu0 0.0
        %245 = vmatpush1.msra.mxu0 0.0
        %246 = vmatprep.subr.mxu0 0.0
        %247 = vmatpush1.msra.mxu0 0.0
        %248 = vmatprep.subr.mxu0 0.0
        %249 = vmatpush1.msra.mxu0 0.0
        %250 = vmatprep.subr.mxu0 0.0
        %251 = vmatpush1.msra.mxu0 0.0
        %252 = vmatprep.subr.mxu0 0.0
        %253 = vmatpush1.msra.mxu0 0.0
        %254 = vmatprep.subr.mxu0 0.0
        %255 = vmatpush1.msra.mxu0 0.0
        %256 = vmatprep.subr.mxu0 0.0
        %257 = vmatpush1.msra.mxu0 0.0
        %258 = vmatprep.subr.mxu0 0.0
        %259 = vmatpush1.msra.mxu0 0.0
        %260 = vmatprep.subr.mxu0 0.0
        %261 = vmatpush1.msra.mxu0 0.0
        %262 = vmatprep.subr.mxu0 0.0
        %263 = vmatpush1.msra.mxu0 0.0
        %264 = vmatprep.subr.mxu0 0.0
        %265 = vmatpush1.msra.mxu0 0.0
        %266 = vmatprep.subr.mxu0 0.0
        %267 = vmatpush1.msra.mxu0 0.0
        %268 = vmatprep.subr.mxu0 0.0
        %269 = vmatpush1.msra.mxu0 0.0
        %270 = vmatprep.subr.mxu0 0.0
        %271 = vmatpush1.msra.mxu0 0.0
        %272 = vmatprep.subr.mxu0 0.0
        %273 = vmatpush1.msra.mxu0 0.0
        %274 = vmatprep.subr.mxu0 0.0
        %275 = vmatpush1.msra.mxu0 0.0
        %276 = vmatprep.subr.mxu0 0.0
        %277 = vmatpush1.msra.mxu0 0.0
        %278 = vmatprep.subr.mxu0 0.0
        %279 = vmatpush1.msra.mxu0 0.0
        %280 = vmatprep.subr.mxu0 0.0
        %281 = vmatpush1.msra.mxu0 0.0
        %282 = vmatprep.subr.mxu0 0.0
        %283 = vmatpush1.msra.mxu0 0.0
        %284 = vmatprep.subr.mxu0 0.0
        %285 = vmatpush1.msra.mxu0 0.0
        %286 = vmatprep.mubr.f32.mxu0 0.0
        %287 = vmatmul.mubr.f32.gmra.mrb[0].mxu0 %v220
        %v288 = vpop.f32.mrb[0].mxu0
        %v289 = vadd.f32 0.0, %v288
        %v290 = vpop.f32.mrb[0].mxu0
        %v291 = vadd.f32 0.0, %v290
        %292 = vdwg.mxu0
        %v293 = vld [vmem:[%s2] sm:$0x1]
        %v295 = vrot.slane %v291, 7
        %vm297 = vcmask 1040384
        %v298 = vsel %vm297, 0.0, %v295
        %v299 = vrot.slane %v291, 1
        %v301 = vsel %vm297, %v299, 0.0
        %v302 = vadd.f32 %v289, %v298
        %304 = vrot.lane.b32.xlu0 %v301, 112
        %v305 = vpop.permute.xlu0 %304
        %v307 = vadd.f32 %v289, %v305
        %vm308 = vcmask 64512
        %v309 = vsel %vm308, %v302, %v289
        %vm310 = vcmask 982016
        %v311 = vsel %vm310, %v309, %v307
        %v313 = vlaneseq
        %v314 = vshrl.u32 %v313, 7
        %v315 = vsub.s32 0, %v314
        %v316 = vrot.slane %v293, %v315
        %v318 = vadd.f32 %v311, %v316
        %319 = vst [vmem:[%s200] sm:$0x3] %v318
        %s320 = sand.u32 %s97, 1
        %s321 = scalar_lea.sflag [#allocation4], %s320
        %s322 = sand.u32 %s97, 1
        %s323 = smul.addr %s322, 2
        %s324 = scalar_lea.vmem [#allocation7], %s323
        // Predicated region
        $region41: #{tpu_custom_call.1} parent=31 // pred_check
          %p325 = pneg %p107
        $region42: #{tpu_custom_call.1} parent=31 // pred_check_branch
          %327 = sbr.rel (%p325) target = $region44
        $region43: #{tpu_custom_call.1} parent=31 // pred_region
          %s329 = ssub.s32 32, 32
          %330 = vsyncadd %s321, %s329
          %s331 = smul.addr %s21, 32
          %s332 = scalar_lea.hbm %s3, %s331
          %s334 = sshll.u32 %s324, 4
          %s335 = int_to_ptr.vmem [resolvable:$true] %s334
          %337 = dma.vmem_to_hbm [thread:$0]  %s335, 32, %s332, %s321
        $region44: #{tpu_custom_call.1} parent=31 // pred_fallthru
          _
      $region32: #{tpu_custom_call.1} parent=5 // pred_fallthru
        _
      %p338 = scmp.le.s32.totalorder 2, %s16
      // Predicated region
      $region45: #{tpu_custom_call.1} parent=5 // pred_check
        %p339 = pneg %p338
      $region46: #{tpu_custom_call.1} parent=5 // pred_check_branch
        %341 = sbr.rel (%p339) target = $region48
      $region47: #{tpu_custom_call.1} parent=5 // pred_region
        %s342 = ssub.s32 %s16, 2
        // Predicated region
        $region49: #{tpu_custom_call.1} parent=47 // pred_check
          %p343 = pneg %p113
        $region50: #{tpu_custom_call.1} parent=47 // pred_check_branch
          %345 = sbr.rel (%p343) target = $region52
        $region51: #{tpu_custom_call.1} parent=47 // pred_region
          %s346 = sand.u32 %s98, 1
          %s347 = scalar_lea.sflag [#allocation4], %s346
          %s348 = sand.u32 %s98, 1
          %s349 = smul.addr %s348, 2
          %s350 = scalar_lea.vmem [#allocation7], %s349
          %351 = dma.done %s347, 32
        $region52: #{tpu_custom_call.1} parent=47 // pred_fallthru
          _
      $region48: #{tpu_custom_call.1} parent=5 // pred_fallthru
        _
    $region6: #{tpu_custom_call.1} parent=1 // loop_footer
      %s20 = sadd.s32 1, %s16
    $region7: #{tpu_custom_call.1} parent=1 // loop_footer_branch
      %15 = sbr.rel target = $region3
    $region8: #{tpu_custom_call.1} parent=1 // loop_exit
      _
    %352 = vsyncpa [#allocation3], 1
    %s353 = scalar_lea.sflag [#allocation3], 1
    %354 = vsyncpa %s353, 1
    %355 = vsyncpa [#allocation6], 1
    %356 = vsyncpa [#allocation4], 1
    %s357 = scalar_lea.sflag [#allocation4], 1
    %358 = vsyncpa %s357, 1

</llo_original>
